<compile_context>
chip_gen: v7x
topology: tpu7x:2x2x1
jax: 0.10.0
libtpu: 0.0.40
codegen_flags: <defaults>
</compile_context>

<pallas_src>
import functools

import jax
import jax.numpy as jnp
from jax.experimental import pallas as pl
from jax.experimental.pallas import tpu as pltpu

_LANE = 128
_VMEM_BUDGET = 12 * 1024 * 1024   # bytes: double-buffered inputs + accumulators
_VMEM_LIMIT = 32 * 1024 * 1024    # scoped VMEM limit for Mosaic (<= v7x 64 MiB)


def _round_up(x, m):
    return (x + m - 1) // m * m


# ----------------------------- multiclass -----------------------------------

def _dice_multiclass_kernel(logits_ref, target_ref, out_ref,
                            inte_ref, card_ref, *, hw, hw_tile, ragged):
    """One (C, hw_tile) spatial tile of one sample."""
    h = pl.program_id(1)
    n_tiles = pl.num_programs(1)

    @pl.when(h == 0)
    def _init():
        inte_ref[...] = jnp.zeros_like(inte_ref)
        card_ref[...] = jnp.zeros_like(card_ref)

    def accumulate(masked):
        x = logits_ref[...].astype(jnp.float32)              # (C, hw_tile)
        t = target_ref[...]                                   # (1, hw_tile) int32
        num_classes = x.shape[0]

        if masked:
            lane = jax.lax.broadcasted_iota(jnp.int32, (1, hw_tile), 1)
            valid = (h * hw_tile + lane) < hw                 # (1, hw_tile) bool
            # Mask BEFORE exp: the ragged last block may hold garbage beyond hw
            # (no wrapper pad) and 0 * NaN would survive a post-softmax mask.
            x = jnp.where(valid, x, 0.0)

        # Softmax over the class (sublane) axis; normalization on the EUP.
        m = jnp.max(x, axis=0, keepdims=True)
        e = jnp.exp(x - m)
        p = e * pl.reciprocal(jnp.sum(e, axis=0, keepdims=True), approx=True)

        # One-hot target mask via class iota (vectorized class loop).
        cls = jax.lax.broadcasted_iota(jnp.int32, (num_classes, hw_tile), 0)
        onehot = (t == cls).astype(jnp.float32)               # (C, hw_tile)

        if masked:
            vf = valid.astype(jnp.float32)
            p = p * vf
            onehot = onehot * vf

        # Full-width accumulation (VPU adds); lane reduce deferred to finalize.
        inte_ref[...] += onehot * p
        card_ref[...] += onehot + p * p

    if ragged:
        @pl.when(h < n_tiles - 1)
        def _fast():
            accumulate(False)

        @pl.when(h == n_tiles - 1)
        def _edge():
            accumulate(True)
    else:
        accumulate(False)

    @pl.when(h == n_tiles - 1)
    def _fin():
        num_classes = inte_ref.shape[0]
        inte = jnp.sum(inte_ref[...], axis=1, keepdims=True)          # (C, 1)
        card = jnp.sum(card_ref[...], axis=1, keepdims=True)          # (C, 1)
        dice = 2.0 * inte / (card + 1e-6)                             # exact divide
        out_ref[...] = jnp.sum(dice, axis=0, keepdims=True) * (1.0 / num_classes)


def _dice_multiclass(logits, target):
    N, C, H, W = logits.shape
    hw = H * W
    hw_pad = _round_up(hw, _LANE)

    x = logits.reshape(N, C, hw)                  # free reshape; keep dtype (bf16 ok)
    t = target.reshape(N, 1, hw)
    if t.dtype != jnp.int32:
        t = t.astype(jnp.int32)
    if hw_pad != hw:
        # Lane alignment only (<=127 elems); aligned spatial sizes skip the copy.
        x = jnp.pad(x, ((0, 0), (0, 0), (0, hw_pad - hw)))
        t = jnp.pad(t, ((0, 0), (0, 0), (0, hw_pad - hw)))

    # Tile size from a VMEM byte budget: 2x double-buffered logits blocks +
    # 2x double-buffered target blocks + 2 full-width f32 accumulators.
    per_lane = 2 * C * x.dtype.itemsize + 2 * 4 + 2 * C * 4
    budget_lanes = max(_LANE, (_VMEM_BUDGET // per_lane) // _LANE * _LANE)
    hw_tile = min(hw_pad, min(32768, budget_lanes))
    n_tiles = pl.cdiv(hw_pad, hw_tile)
    ragged = (hw_pad % hw_tile != 0) or (hw_pad != hw)

    kernel = functools.partial(_dice_multiclass_kernel,
                               hw=hw, hw_tile=hw_tile, ragged=ragged)
    bytes_accessed = x.size * x.dtype.itemsize + t.size * 4 + N * 4
    dice = pl.pallas_call(
        kernel,
        out_shape=jax.ShapeDtypeStruct((N, 1, 1), jnp.float32),
        grid=(N, n_tiles),
        in_specs=[
            pl.BlockSpec((None, C, hw_tile), lambda n, h: (n, 0, h)),
            pl.BlockSpec((None, 1, hw_tile), lambda n, h: (n, 0, h)),
        ],
        out_specs=pl.BlockSpec((None, 1, 1), lambda n, h: (n, 0, 0)),
        scratch_shapes=[pltpu.VMEM((C, hw_tile), jnp.float32),
                        pltpu.VMEM((C, hw_tile), jnp.float32)],
        compiler_params=pltpu.CompilerParams(
            dimension_semantics=("parallel", "arbitrary"),
            vmem_limit_bytes=_VMEM_LIMIT),
        cost_estimate=pl.CostEstimate(
            flops=int(12 * N * C * hw_pad),
            transcendentals=int(N * (C + 1) * hw_pad),
            bytes_accessed=int(bytes_accessed)),
    )(x, t)
    return 1.0 - jnp.mean(dice)


# ------------------------------- binary -------------------------------------

def _dice_binary_kernel(logits_ref, target_ref, out_ref,
                        inte_ref, card_ref, *, hw, r_tile, ragged):
    """One sublane-dense (r_tile, 128) pixel tile of one sample."""
    h = pl.program_id(1)
    n_tiles = pl.num_programs(1)

    @pl.when(h == 0)
    def _init():
        inte_ref[...] = jnp.zeros_like(inte_ref)
        card_ref[...] = jnp.zeros_like(card_ref)

    def accumulate(masked):
        x = logits_ref[...].astype(jnp.float32)               # (r_tile, 128)
        t = target_ref[...]

        if masked:
            row = jax.lax.broadcasted_iota(jnp.int32, x.shape, 0)
            lane = jax.lax.broadcasted_iota(jnp.int32, x.shape, 1)
            idx = (h * r_tile + row) * _LANE + lane
            valid = idx < hw
            x = jnp.where(valid, x, 0.0)                       # garbage-safe pre-sigmoid

        p = pl.reciprocal(1.0 + jnp.exp(-x), approx=True)      # sigmoid via EUP recip
        mask = (t == 1).astype(jnp.float32)

        if masked:
            vf = valid.astype(jnp.float32)
            p = p * vf
            mask = mask * vf

        inte_ref[...] += jnp.sum(mask * p, axis=0, keepdims=True)       # (1, 128)
        card_ref[...] += jnp.sum(mask + p * p, axis=0, keepdims=True)   # (1, 128)

    if ragged:
        @pl.when(h < n_tiles - 1)
        def _fast():
            accumulate(False)

        @pl.when(h == n_tiles - 1)
        def _edge():
            accumulate(True)
    else:
        accumulate(False)

    @pl.when(h == n_tiles - 1)
    def _fin():
        inte = jnp.sum(inte_ref[...], axis=1, keepdims=True)            # (1, 1)
        card = jnp.sum(card_ref[...], axis=1, keepdims=True)
        out_ref[...] = 2.0 * inte / (card + 1e-6)


def _dice_binary(logits, target):
    N, H, W = logits.shape
    hw = H * W
    hw_pad = _round_up(hw, _LANE)
    rows = hw_pad // _LANE

    x = logits.reshape(N, hw)                     # keep incoming dtype (bf16 ok)
    t = target.reshape(N, hw)                     # incoming dtype; no wrapper cast
    if hw_pad != hw:
        # Only to the next 128-lane multiple, needed for the (rows, 128) layout.
        x = jnp.pad(x, ((0, 0), (0, hw_pad - hw)))
        t = jnp.pad(t, ((0, 0), (0, hw_pad - hw)))
    x = x.reshape(N, rows, _LANE)                 # sublane-dense layout
    t = t.reshape(N, rows, _LANE)

    per_row = 2 * _LANE * (x.dtype.itemsize + t.dtype.itemsize)   # double-buffered
    budget_rows = max(8, (_VMEM_BUDGET // per_row) // 8 * 8)
    cap = min(2048, budget_rows)
    r_tile = rows if rows <= cap else cap
    n_tiles = pl.cdiv(rows, r_tile)
    ragged = (rows % r_tile != 0) or (hw_pad != hw)

    kernel = functools.partial(_dice_binary_kernel,
                               hw=hw, r_tile=r_tile, ragged=ragged)
    bytes_accessed = x.size * x.dtype.itemsize + t.size * t.dtype.itemsize + N * 4
    dice = pl.pallas_call(
        kernel,
        out_shape=jax.ShapeDtypeStruct((N, 1, 1), jnp.float32),
        grid=(N, n_tiles),
        in_specs=[
            pl.BlockSpec((None, r_tile, _LANE), lambda n, h: (n, h, 0)),
            pl.BlockSpec((None, r_tile, _LANE), lambda n, h: (n, h, 0)),
        ],
        out_specs=pl.BlockSpec((None, 1, 1), lambda n, h: (n, 0, 0)),
        scratch_shapes=[pltpu.VMEM((1, _LANE), jnp.float32),
                        pltpu.VMEM((1, _LANE), jnp.float32)],
        compiler_params=pltpu.CompilerParams(
            dimension_semantics=("parallel", "arbitrary"),
            vmem_limit_bytes=_VMEM_LIMIT),
        cost_estimate=pl.CostEstimate(
            flops=int(8 * N * hw_pad),
            transcendentals=int(2 * N * hw_pad),
            bytes_accessed=int(bytes_accessed)),
    )(x, t)
    return 1.0 - jnp.mean(dice)


# ------------------------------- wrapper -------------------------------------

def dice_loss(logits, target, ignore_index=255):
    """Pallas implementation of DiceLoss.forward (ignore_index unused, as in
    the PyTorch module)."""
    del ignore_index
    if target.ndim != logits.ndim and logits.shape[1] != 1:
        return _dice_multiclass(logits, target)
    # binary / single-channel branch
    if logits.ndim == 4:
        if logits.shape[1] != 1:
            # TODO(synk): PyTorch's degenerate same-rank multi-channel case
            # (sigmoid + sum over dims (1,2) of 4-D logits) is not replicated.
            raise ValueError("binary branch expects single-channel 4-D or 3-D logits")
        logits = logits[:, 0]
    return _dice_binary(logits, target)


def _dice_loss_ref(logits, target):
    """Pure-JAX reference mirroring the PyTorch forward."""
    if target.ndim != logits.ndim and logits.shape[1] != 1:
        p = jax.nn.softmax(logits.astype(jnp.float32), axis=1)
        num_classes = logits.shape[1]
        loss = 0.0
        for c in range(num_classes):
            mask = (target == c).astype(p.dtype)
            inte = (mask * p[:, c]).sum(axis=(1, 2))
            card = (mask + p[:, c] ** 2).sum(axis=(1, 2))
            loss = loss + 2 * inte / (card + 1e-6)
        loss = loss / num_classes
    else:
        if logits.shape[1] == 1:
            logits = logits[:, 0]
        p = jax.nn.sigmoid(logits.astype(jnp.float32))
        mask = (target == 1).astype(p.dtype)
        inte = (mask * p).sum(axis=(1, 2))
        card = (mask + p ** 2).sum(axis=(1, 2))
        loss = 2 * inte / (card + 1e-6)
    return 1.0 - loss.mean()


if __name__ == "__main__":
    key = jax.random.PRNGKey(0)
    k1, k2, k3, k4, k5, k6, k7, k8 = jax.random.split(key, 8)

    # multiclass, lane-aligned spatial size (copy-free path)
    N, C, H, W = 2, 4, 16, 16
    logits = jax.random.normal(k1, (N, C, H, W), dtype=jnp.float32)
    target = jax.random.randint(k2, (N, H, W), 0, C, dtype=jnp.int32)
    loss = jax.block_until_ready(dice_loss(logits, target))
    ref = _dice_loss_ref(logits, target)
    # approx (EUP) reciprocal in the hot path trades ~1e-3 relative precision
    assert jnp.allclose(loss, ref, atol=2e-2, rtol=2e-2), (loss, ref)

    # binary, lane-aligned
    blogits = jax.random.normal(k3, (N, 1, H, W), dtype=jnp.float32)
    btarget = (jax.random.uniform(k4, (N, H, W)) > 0.5).astype(jnp.int32)
    bloss = jax.block_until_ready(dice_loss(blogits, btarget))
    bref = _dice_loss_ref(blogits, btarget)
    assert jnp.allclose(bloss, bref, atol=2e-2, rtol=2e-2), (bloss, bref)

    # multiclass, ragged spatial size (exercises the in-kernel masked last tile)
    Ho, Wo = 10, 13
    logits_o = jax.random.normal(k5, (N, C, Ho, Wo), dtype=jnp.float32)
    target_o = jax.random.randint(k6, (N, Ho, Wo), 0, C, dtype=jnp.int32)
    loss_o = jax.block_until_ready(dice_loss(logits_o, target_o))
    ref_o = _dice_loss_ref(logits_o, target_o)
    assert jnp.allclose(loss_o, ref_o, atol=2e-2, rtol=2e-2), (loss_o, ref_o)

    # binary, ragged spatial size
    blogits_o = jax.random.normal(k7, (N, 1, Ho, Wo), dtype=jnp.float32)
    btarget_o = (jax.random.uniform(k8, (N, Ho, Wo)) > 0.5).astype(jnp.int32)
    bloss_o = jax.block_until_ready(dice_loss(blogits_o, btarget_o))
    bref_o = _dice_loss_ref(blogits_o, btarget_o)
    assert jnp.allclose(bloss_o, bref_o, atol=2e-2, rtol=2e-2), (bloss_o, bref_o)

    print("KERNEL_OK")
</pallas_src>

<mosaic_0001>
module attributes {stable_mosaic.version = 11 : i64} {
  func.func @_dice_multiclass_kernel(%arg0: i32, %arg1: i32, %arg2: memref<1x4x256xf32, #tpu.memory_space<vmem>>, %arg3: memref<1x1x256xi32, #tpu.memory_space<vmem>>, %arg4: memref<1x1x1xf32, #tpu.memory_space<vmem>>, %arg5: memref<4x256xf32, #tpu.memory_space<vmem>>, %arg6: memref<4x256xf32, #tpu.memory_space<vmem>>) attributes {dimension_semantics = [#tpu.dimension_semantics<parallel>, #tpu.dimension_semantics<arbitrary>], iteration_bounds = array<i64: 2, 1>, scalar_prefetch = 0 : i64, scratch_operands = 2 : i64, tpu.core_type = #tpu.core_type<tc>, window_params = [{transform_indices = @transform_0, window_bounds = array<i64: 1, 4, 256>}, {transform_indices = @transform_1, window_bounds = array<i64: 1, 1, 256>}, {transform_indices = @transform_2, window_bounds = array<i64: 1, 1, 1>}]} {
    %c0_i32 = arith.constant 0 : i32
    %0 = arith.cmpi eq, %arg1, %c0_i32 : i32
    %1 = arith.extui %0 : i1 to i32
    %c0_i32_0 = arith.constant 0 : i32
    %2 = arith.cmpi ne, %1, %c0_i32_0 : i32
    scf.if %2 {
      %cst_17 = arith.constant 0.000000e+00 : f32
      %34 = vector.broadcast %cst_17 : f32 to vector<4x256xf32>
      %c0_18 = arith.constant 0 : index
      %c0_19 = arith.constant 0 : index
      %35 = vector.load %arg5[%c0_18, %c0_19] : memref<4x256xf32, #tpu.memory_space<vmem>>, vector<4x256xf32>
      tpu.vector_store %arg5[%c0_18, %c0_19], %34 {strides = array<i32>} : memref<4x256xf32, #tpu.memory_space<vmem>>, vector<4x256xf32>,
      %cst_20 = arith.constant 0.000000e+00 : f32
      %36 = vector.broadcast %cst_20 : f32 to vector<4x256xf32>
      %c0_21 = arith.constant 0 : index
      %c0_22 = arith.constant 0 : index
      %37 = vector.load %arg6[%c0_21, %c0_22] : memref<4x256xf32, #tpu.memory_space<vmem>>, vector<4x256xf32>
      tpu.vector_store %arg6[%c0_21, %c0_22], %36 {strides = array<i32>} : memref<4x256xf32, #tpu.memory_space<vmem>>, vector<4x256xf32>,
    } else {
    }
    %c0 = arith.constant 0 : index
    %c0_1 = arith.constant 0 : index
    %c0_2 = arith.constant 0 : index
    %3 = vector.load %arg2[%c0, %c0_1, %c0_2] : memref<1x4x256xf32, #tpu.memory_space<vmem>>, vector<1x4x256xf32>
    %4 = vector.shape_cast %3 : vector<1x4x256xf32> to vector<4x256xf32>
    %c0_3 = arith.constant 0 : index
    %c0_4 = arith.constant 0 : index
    %c0_5 = arith.constant 0 : index
    %5 = vector.load %arg3[%c0_3, %c0_4, %c0_5] : memref<1x1x256xi32, #tpu.memory_space<vmem>>, vector<1x1x256xi32>
    %6 = vector.shape_cast %5 : vector<1x1x256xi32> to vector<1x256xi32>
    %cst = arith.constant dense<0xFF800000> : vector<256xf32>
    %7 = vector.multi_reduction <maximumf>, %4, %cst [0] : vector<4x256xf32> to vector<256xf32>
    %8 = vector.shape_cast %7 : vector<256xf32> to vector<1x256xf32>
    %9 = vector.broadcast %8 : vector<1x256xf32> to vector<4x256xf32>
    %10 = arith.subf %4, %9 : vector<4x256xf32>
    %11 = math.exp %10 : vector<4x256xf32>
    %cst_6 = arith.constant dense<0.000000e+00> : vector<256xf32>
    %12 = vector.multi_reduction <add>, %11, %cst_6 [0] : vector<4x256xf32> to vector<256xf32>
    %13 = vector.shape_cast %12 : vector<256xf32> to vector<1x256xf32>
    %14 = tpu.reciprocal %13 {approx = true} : vector<1x256xf32> -> vector<1x256xf32>
    %15 = vector.broadcast %14 : vector<1x256xf32> to vector<4x256xf32>
    %16 = arith.mulf %11, %15 : vector<4x256xf32>
    %17 = tpu.iota {dimensions = array<i32: 0>} : vector<4x256xi32>
    %18 = vector.broadcast %6 : vector<1x256xi32> to vector<4x256xi32>
    %19 = arith.cmpi eq, %18, %17 : vector<4x256xi32>
    %20 = arith.extui %19 : vector<4x256xi1> to vector<4x256xi32>
    %21 = arith.sitofp %20 : vector<4x256xi32> to vector<4x256xf32>
    %c0_7 = arith.constant 0 : index
    %c0_8 = arith.constant 0 : index
    %22 = vector.load %arg5[%c0_7, %c0_8] : memref<4x256xf32, #tpu.memory_space<vmem>>, vector<4x256xf32>
    %23 = arith.mulf %21, %16 : vector<4x256xf32>
    %24 = arith.addf %22, %23 : vector<4x256xf32>
    %c0_9 = arith.constant 0 : index
    %c0_10 = arith.constant 0 : index
    %25 = vector.load %arg5[%c0_9, %c0_10] : memref<4x256xf32, #tpu.memory_space<vmem>>, vector<4x256xf32>
    tpu.vector_store %arg5[%c0_9, %c0_10], %24 {strides = array<i32>} : memref<4x256xf32, #tpu.memory_space<vmem>>, vector<4x256xf32>,
    %c0_11 = arith.constant 0 : index
    %c0_12 = arith.constant 0 : index
    %26 = vector.load %arg6[%c0_11, %c0_12] : memref<4x256xf32, #tpu.memory_space<vmem>>, vector<4x256xf32>
    %27 = arith.mulf %16, %16 : vector<4x256xf32>
    %28 = arith.addf %21, %27 : vector<4x256xf32>
    %29 = arith.addf %26, %28 : vector<4x256xf32>
    %c0_13 = arith.constant 0 : index
    %c0_14 = arith.constant 0 : index
    %30 = vector.load %arg6[%c0_13, %c0_14] : memref<4x256xf32, #tpu.memory_space<vmem>>, vector<4x256xf32>
    tpu.vector_store %arg6[%c0_13, %c0_14], %29 {strides = array<i32>} : memref<4x256xf32, #tpu.memory_space<vmem>>, vector<4x256xf32>,
    %c0_i32_15 = arith.constant 0 : i32
    %31 = arith.cmpi eq, %arg1, %c0_i32_15 : i32
    %32 = arith.extui %31 : i1 to i32
    %c0_i32_16 = arith.constant 0 : i32
    %33 = arith.cmpi ne, %32, %c0_i32_16 : i32
    scf.if %33 {
      %c0_17 = arith.constant 0 : index
      %c0_18 = arith.constant 0 : index
      %34 = vector.load %arg5[%c0_17, %c0_18] : memref<4x256xf32, #tpu.memory_space<vmem>>, vector<4x256xf32>
      %cst_19 = arith.constant dense<0.000000e+00> : vector<4xf32>
      %35 = vector.multi_reduction <add>, %34, %cst_19 [1] : vector<4x256xf32> to vector<4xf32>
      %36 = vector.shape_cast %35 : vector<4xf32> to vector<4x1xf32>
      %c0_20 = arith.constant 0 : index
      %c0_21 = arith.constant 0 : index
      %37 = vector.load %arg6[%c0_20, %c0_21] : memref<4x256xf32, #tpu.memory_space<vmem>>, vector<4x256xf32>
      %cst_22 = arith.constant dense<0.000000e+00> : vector<4xf32>
      %38 = vector.multi_reduction <add>, %37, %cst_22 [1] : vector<4x256xf32> to vector<4xf32>
      %39 = vector.shape_cast %38 : vector<4xf32> to vector<4x1xf32>
      %cst_23 = arith.constant 2.000000e+00 : f32
      %40 = vector.broadcast %cst_23 : f32 to vector<4x1xf32>
      %41 = arith.mulf %40, %36 : vector<4x1xf32>
      %cst_24 = arith.constant 9.99999997E-7 : f32
      %42 = vector.broadcast %cst_24 : f32 to vector<4x1xf32>
      %43 = arith.addf %39, %42 : vector<4x1xf32>
      %44 = arith.divf %41, %43 : vector<4x1xf32>
      %cst_25 = arith.constant dense<0.000000e+00> : vector<1xf32>
      %45 = vector.multi_reduction <add>, %44, %cst_25 [0] : vector<4x1xf32> to vector<1xf32>
      %46 = vector.shape_cast %45 : vector<1xf32> to vector<1x1xf32>
      %cst_26 = arith.constant 2.500000e-01 : f32
      %47 = vector.broadcast %cst_26 : f32 to vector<1x1xf32>
      %48 = arith.mulf %46, %47 : vector<1x1xf32>
      %c0_27 = arith.constant 0 : index
      %c0_28 = arith.constant 0 : index
      %c0_29 = arith.constant 0 : index
      %49 = vector.load %arg4[%c0_27, %c0_28, %c0_29] : memref<1x1x1xf32, #tpu.memory_space<vmem>>, vector<1x1x1xf32>
      %50 = vector.shape_cast %49 : vector<1x1x1xf32> to vector<1x1xf32>
      %51 = vector.shape_cast %48 : vector<1x1xf32> to vector<1x1x1xf32>
      tpu.vector_store %arg4[%c0_27, %c0_28, %c0_29], %51 {strides = array<i32>} : memref<1x1x1xf32, #tpu.memory_space<vmem>>, vector<1x1x1xf32>,
    } else {
    }
    return
  }
  func.func @transform_0(%arg0: i32, %arg1: i32) -> (i32, i32, i32) {
    %c0_i32 = arith.constant 0 : i32
    %c0_i32_0 = arith.constant 0 : i32
    return %arg0, %c0_i32, %arg1 : i32, i32, i32
  }
  func.func @transform_1(%arg0: i32, %arg1: i32) -> (i32, i32, i32) {
    %c0_i32 = arith.constant 0 : i32
    %c0_i32_0 = arith.constant 0 : i32
    return %arg0, %c0_i32, %arg1 : i32, i32, i32
  }
  func.func @transform_2(%arg0: i32, %arg1: i32) -> (i32, i32, i32) {
    %c0_i32 = arith.constant 0 : i32
    %c0_i32_0 = arith.constant 0 : i32
    %c0_i32_1 = arith.constant 0 : i32
    return %arg0, %c0_i32, %c0_i32_0 : i32, i32, i32
  }
}

</mosaic_0001>

<llo_original>
// kernel: tpu_custom_call.1
$region0: #{tpu_custom_call.1}
  #allocation0 [shape = 'u32[]', space=smem, size = 0x4, offset = 0x4, fixed_abs, tag = 'smem constant byte address 0x4 - core index']
  #allocation1 [shape = 'u32[144,128]{1,0:T(1,128)}', space=vmem, size = 0x12000, scoped, tag = 'internal scratch']
  #allocation2 [shape = 'f32[4,256]{1,0:T(4,128)}', space=vmem, size = 0x1000, scoped, tag = 'scratch operand']
  #allocation3 [shape = 'f32[4,256]{1,0:T(4,128)}', space=vmem, size = 0x1000, scoped, tag = 'scratch operand']
  %s0 = inlined_call_operand.hbm [shape: f32[2,4,256], index: 0, kind: input, shape index: {}]
  %s1 = inlined_call_operand.hbm [shape: s32[2,1,256], index: 1, kind: input, shape index: {}]
  %s2 = inlined_call_operand.vmem [shape: f32[2,1,1], index: 2, kind: output, shape index: {}]
  %s3 = sld [smem:[#allocation0]]
  $region57: #{tpu_custom_call.1} parent=0
    _
  %s5 = ssub.s32 1, %s3
  %s6 = scalar_select 0, %s5, %s3
  $region1: #{tpu_custom_call.1} parent=0
    #allocation4 [shape = 'u8[8192]{0}', space=vmem, size = 0x2000, scoped, tag = 'input window, operand 0']
    #allocation5 [shape = 's32[2]{0}', space=sflag, size = 0x8, scoped, tag = 'scoped memory for tpu_custom_call.1']
    #allocation6 [shape = 'u8[2048]{0}', space=vmem, size = 0x800, scoped, tag = 'input window, operand 1']
    #allocation7 [shape = 's32[2]{0}', space=sflag, size = 0x8, scoped, tag = 'scoped memory for tpu_custom_call.1']
    %7 = vsyncpa [#allocation5], 0
    %s8 = scalar_lea.sflag [#allocation5], 1
    %9 = vsyncpa %s8, 0
    %10 = vsyncpa [#allocation7], 0
    %s11 = scalar_lea.sflag [#allocation7], 1
    %12 = vsyncpa %s11, 0
    loop: start=0, step=1, limit=4
    $region2: #{tpu_custom_call.1} parent=1 // loop_pre_header
      _
    $region3: #{tpu_custom_call.1} parent=1 // loop_header
      %s14 = sphi 0, %s18
      %p15 = scmp.ge.s32.totalorder %s14, 4
      %s21 = sphi 0, %s33
      %s22 = sphi 0, %s29
      %s23 = sphi 0, %s21
      %s24 = sphi 0, %s22
      %s25 = sphi 0, %s23
      %s26 = sphi 0, %s24
      %s38 = sphi 0, %s40
      %s41 = sphi 0, %s38
      %s42 = sphi 0, %s41
      %s58 = sphi 0, %s42
      %s66 = sphi 0, %s68
      %s69 = sphi 0, %s66
      %s70 = sphi 0, %s69
      %s86 = sphi 0, %s70
      %s92 = sphi 0, %s94
      %s95 = sphi 0, %s92
      %s96 = sphi 0, %s95
      %s112 = sphi 0, %s96
    $region4: #{tpu_custom_call.1} parent=1 // loop_header_branch
      %17 = sbr.rel (%p15) target = $region8
    $region5: #{tpu_custom_call.1} parent=1 // loop_body
      %s19 = ssub.s32 %s14, 1
      %s20 = ssub.s32 %s14, 2
      %s27 = sadd.s32 1, %s22
      %p28 = scmp.ge.s32.totalorder %s27, 1
      %s29 = scalar_select %p28, 0, %s27
      %s30 = sadd.s32 1, %s21
      %s31 = scalar_select %p28, %s30, %s21
      %p32 = scmp.ge.s32.totalorder %s31, 2
      %s33 = scalar_select %p32, 0, %s31
      %s34 = ssub.s32 %s21, %s33
      %s35 = ssub.s32 %s22, %s29
      %s36 = sor.u32 %s34, %s35
      %p37 = scmp.eq.s32.totalorder %s36, 0
      %s39 = sadd.s32 %s38, 1
      %s40 = scalar_select %p37, %s38, %s39
      %p43 = pneg %p37
      %p44 = scmp.eq.s32.totalorder %s14, 1
      %p45 = por %p43, %p44
      %p46 = scmp.ne.s32.totalorder %s38, %s41
      %p47 = scmp.eq.s32.totalorder %s14, 0
      %p48 = por %p46, %p47
      %p49 = scmp.ne.s32.totalorder %s38, %s41
      %p50 = scmp.eq.s32.totalorder %s19, 1
      %p51 = por %p49, %p50
      %p52 = scmp.ne.s32.totalorder %s41, %s42
      %p53 = scmp.eq.s32.totalorder %s19, 0
      %p54 = por %p52, %p53
      %p55 = scmp.ne.s32.totalorder %s41, %s42
      %p56 = scmp.eq.s32.totalorder %s20, 1
      %p57 = por %p55, %p56
      %p59 = scmp.ne.s32.totalorder %s42, %s58
      %p60 = scmp.eq.s32.totalorder %s20, 0
      %p61 = por %p59, %p60
      %s62 = ssub.s32 %s21, %s33
      %s63 = ssub.s32 %s22, %s29
      %s64 = sor.u32 %s62, %s63
      %p65 = scmp.eq.s32.totalorder %s64, 0
      %s67 = sadd.s32 %s66, 1
      %s68 = scalar_select %p65, %s66, %s67
      %p71 = pneg %p65
      %p72 = scmp.eq.s32.totalorder %s14, 1
      %p73 = por %p71, %p72
      %p74 = scmp.ne.s32.totalorder %s66, %s69
      %p75 = scmp.eq.s32.totalorder %s14, 0
      %p76 = por %p74, %p75
      %p77 = scmp.ne.s32.totalorder %s66, %s69
      %p78 = scmp.eq.s32.totalorder %s19, 1
      %p79 = por %p77, %p78
      %p80 = scmp.ne.s32.totalorder %s69, %s70
      %p81 = scmp.eq.s32.totalorder %s19, 0
      %p82 = por %p80, %p81
      %p83 = scmp.ne.s32.totalorder %s69, %s70
      %p84 = scmp.eq.s32.totalorder %s20, 1
      %p85 = por %p83, %p84
      %p87 = scmp.ne.s32.totalorder %s70, %s86
      %p88 = scmp.eq.s32.totalorder %s20, 0
      %p89 = por %p87, %p88
      %s90 = ssub.s32 %s21, %s33
      %p91 = scmp.eq.s32.totalorder %s90, 0
      %s93 = sadd.s32 %s92, 1
      %s94 = scalar_select %p91, %s92, %s93
      %p97 = pneg %p91
      %p98 = scmp.eq.s32.totalorder %s14, 1
      %p99 = por %p97, %p98
      %p100 = scmp.ne.s32.totalorder %s92, %s95
      %p101 = scmp.eq.s32.totalorder %s14, 0
      %p102 = por %p100, %p101
      %p103 = scmp.ne.s32.totalorder %s92, %s95
      %p104 = scmp.eq.s32.totalorder %s19, 1
      %p105 = por %p103, %p104
      %p106 = scmp.ne.s32.totalorder %s95, %s96
      %p107 = scmp.eq.s32.totalorder %s19, 0
      %p108 = por %p106, %p107
      %p109 = scmp.ne.s32.totalorder %s95, %s96
      %p110 = scmp.eq.s32.totalorder %s20, 1
      %p111 = por %p109, %p110
      %p113 = scmp.ne.s32.totalorder %s96, %s112
      %p114 = scmp.eq.s32.totalorder %s20, 0
      %p115 = por %p113, %p114
      %p116 = scmp.le.s32.totalorder 1, %s14
      %p117 = scmp.lt.s32.totalorder %s14, 3
      %p118 = pnand %p116, %p117
      %p119 = pneg %p118
      // Predicated region
      $region9: #{tpu_custom_call.1} parent=5 // pred_check
        _
      $region10: #{tpu_custom_call.1} parent=5 // pred_check_branch
        %121 = sbr.rel (%p118) target = $region12
      $region11: #{tpu_custom_call.1} parent=5 // pred_region
        %s122 = ssub.s32 %s14, 1
      $region12: #{tpu_custom_call.1} parent=5 // pred_fallthru
        _
      %p123 = scmp.lt.s32.totalorder %s14, 2
      // Predicated region
      $region13: #{tpu_custom_call.1} parent=5 // pred_check
        %p124 = pneg %p123
      $region14: #{tpu_custom_call.1} parent=5 // pred_check_branch
        %126 = sbr.rel (%p124) target = $region16
      $region15: #{tpu_custom_call.1} parent=5 // pred_region
        // Predicated region
        $region17: #{tpu_custom_call.1} parent=15 // pred_check
          %p127 = pneg %p48
        $region18: #{tpu_custom_call.1} parent=15 // pred_check_branch
          %129 = sbr.rel (%p127) target = $region20
        $region19: #{tpu_custom_call.1} parent=15 // pred_region
          %s130 = sand.u32 %s38, 1
          %s131 = scalar_lea.sflag [#allocation5], %s130
          %s132 = sand.u32 %s38, 1
          %s133 = smul.addr %s132, 8
          %s134 = scalar_lea.vmem [#allocation4], %s133
          %s135 = smul.u32 2, %s22
          %s137 = ssub.s32 128, 128
          %138 = vsyncadd %s131, %s137
          %s139 = smul.addr %s21, 2
          %s140 = sadd.s32 %s135, %s139
          %s141 = smul.addr %s140, 64
          %s142 = scalar_lea.hbm %s0, %s141
          %s144 = sshll.u32 %s134, 4
          %s145 = int_to_ptr.vmem [resolvable:$true] %s144
          %147 = dma.hbm_to_vmem [thread:$0]  %s142, 128, %s145, %s131
        $region20: #{tpu_custom_call.1} parent=15 // pred_fallthru
          _
        // Predicated region
        $region21: #{tpu_custom_call.1} parent=15 // pred_check
          %p148 = pneg %p76
        $region22: #{tpu_custom_call.1} parent=15 // pred_check_branch
          %150 = sbr.rel (%p148) target = $region24
        $region23: #{tpu_custom_call.1} parent=15 // pred_region
          %s151 = sand.u32 %s66, 1
          %s152 = scalar_lea.sflag [#allocation7], %s151
          %s153 = sand.u32 %s66, 1
          %s154 = smul.addr %s153, 2
          %s155 = scalar_lea.vmem [#allocation6], %s154
          %s156 = smul.u32 2, %s22
          %s158 = ssub.s32 32, 32
          %159 = vsyncadd %s152, %s158
          %s160 = smul.addr %s21, 2
          %s161 = sadd.s32 %s156, %s160
          %s162 = smul.addr %s161, 16
          %s163 = scalar_lea.hbm %s1, %s162
          %s165 = sshll.u32 %s155, 4
          %s166 = int_to_ptr.vmem [resolvable:$true] %s165
          %168 = dma.hbm_to_vmem [thread:$0]  %s163, 32, %s166, %s152
        $region24: #{tpu_custom_call.1} parent=15 // pred_fallthru
          _
      $region16: #{tpu_custom_call.1} parent=5 // pred_fallthru
        _
      %p169 = scmp.le.s32.totalorder 1, %s14
      %p170 = scmp.lt.s32.totalorder %s14, 3
      %p171 = pnand %p169, %p170
      %p172 = pneg %p171
      // Predicated region
      $region25: #{tpu_custom_call.1} parent=5 // pred_check
        _
      $region26: #{tpu_custom_call.1} parent=5 // pred_check_branch
        %174 = sbr.rel (%p171) target = $region28
      $region27: #{tpu_custom_call.1} parent=5 // pred_region
        %s175 = ssub.s32 %s14, 1
        %s176 = sand.u32 %s41, 1
        %s177 = scalar_lea.sflag [#allocation5], %s176
        %s178 = sand.u32 %s41, 1
        %s179 = smul.addr %s178, 8
        %s180 = scalar_lea.vmem [#allocation4], %s179
        // Predicated region
        $region29: #{tpu_custom_call.1} parent=27 // pred_check
          %p181 = pneg %p54
        $region30: #{tpu_custom_call.1} parent=27 // pred_check_branch
          %183 = sbr.rel (%p181) target = $region32
        $region31: #{tpu_custom_call.1} parent=27 // pred_region
          %184 = dma.done %s177, 128
        $region32: #{tpu_custom_call.1} parent=27 // pred_fallthru
          _
        %s185 = sand.u32 %s69, 1
        %s186 = scalar_lea.sflag [#allocation7], %s185
        %s187 = sand.u32 %s69, 1
        %s188 = smul.addr %s187, 2
        %s189 = scalar_lea.vmem [#allocation6], %s188
        // Predicated region
        $region33: #{tpu_custom_call.1} parent=27 // pred_check
          %p190 = pneg %p82
        $region34: #{tpu_custom_call.1} parent=27 // pred_check_branch
          %192 = sbr.rel (%p190) target = $region36
        $region35: #{tpu_custom_call.1} parent=27 // pred_region
          %193 = dma.done %s186, 32
        $region36: #{tpu_custom_call.1} parent=27 // pred_fallthru
          _
        %s194 = sand.u32 %s41, 1
        %s195 = scalar_lea.sflag [#allocation5], %s194
        %s196 = sand.u32 %s41, 1
        %s197 = smul.addr %s196, 8
        %s198 = scalar_lea.vmem [#allocation4], %s197
        %p199 = pneg %p54
        %p200 = pneg %p51
        %s201 = sand.u32 %s69, 1
        %s202 = scalar_lea.sflag [#allocation7], %s201
        %s203 = sand.u32 %s69, 1
        %s204 = smul.addr %s203, 2
        %s205 = scalar_lea.vmem [#allocation6], %s204
        %p206 = pneg %p82
        %p207 = pneg %p79
        %p208 = pneg %p108
        %p209 = pneg %p105
        %p210 = scmp.lt.s32.totalorder %s23, 1
        %s211 = scalar_select %p210, %s23, 1
        %s212 = scalar_lea.vmem %s2, %s211
        %s213 = smul.u32 2, %s24
        %s214 = smul.u32 2, %s24
        %p215 = scmp.lt.s32.totalorder %s23, 1
        %s216 = scalar_select %p215, %s23, 1
        %s217 = scalar_lea.vmem %s2, %s216
        %p218 = scmp.eq.s32.totalorder %s24, 0
        // Predicated region
        $region37: #{tpu_custom_call.1} parent=27 // pred_check
          %p219 = pneg %p218
        $region38: #{tpu_custom_call.1} parent=27 // pred_check_branch
          %221 = sbr.rel (%p219) target = $region40
        $region39: #{tpu_custom_call.1} parent=27 // pred_region
          %222 = vst [vmem:[#allocation2] sm:$0xff] 0.0
          %223 = vst [vmem:[#allocation3] sm:$0xff] 0.0
        $region40: #{tpu_custom_call.1} parent=27 // pred_fallthru
          _
        %v224 = vld [vmem:[%s180] sm:$0xff]
        %v225 = vld [vmem:[%s189] sm:$0x3]
        %v227 = vcombine.high %v224, %v224
        %vm229 = vcmask 1043456
        %v230 = vsel %vm229, %v224, -inf
        %v231 = vrot.slane %v230, 4
        %v232 = vmax.f32 %v230, %v231
        %v233 = vrot.slane %v232, 2
        %v234 = vmax.f32 %v232, %v233
        %v235 = vrot.slane %v234, 1
        %v236 = vmax.f32 %v234, %v235
        %v237 = vsel %vm229, %v227, -inf
        %v238 = vrot.slane %v237, 4
        %v239 = vmax.f32 %v237, %v238
        %v240 = vrot.slane %v239, 2
        %v241 = vmax.f32 %v239, %v240
        %v242 = vrot.slane %v241, 1
        %v243 = vmax.f32 %v241, %v242
        %v246 = vcombine.low %v236, %v243
        %v248 = vsub.f32 %v224, %v246
        %v249 = vmul.f32 %v248, 1.442695
        %v250 = vpow.pop %v249
        %v252 = vcombine.high %v250, %v250
        %v254 = vsel %vm229, %v250, 0.0
        %v255 = vrot.slane %v254, 4
        %v256 = vadd.f32 %v254, %v255
        %v257 = vrot.slane %v256, 2
        %v258 = vadd.f32 %v256, %v257
        %v259 = vrot.slane %v258, 1
        %v260 = vadd.f32 %v258, %v259
        %v261 = vsel %vm229, %v252, 0.0
        %v262 = vrot.slane %v261, 4
        %v263 = vadd.f32 %v261, %v262
        %v264 = vrot.slane %v263, 2
        %v265 = vadd.f32 %v263, %v264
        %v266 = vrot.slane %v265, 1
        %v267 = vadd.f32 %v265, %v266
        %v268 = vrcp.pop %v260
        %v269 = vrcp.pop %v267
        %v272 = vcombine.low %v268, %v269
        %v274 = vmul.f32 %v250, %v272
        %v275 = vlaneseq
        %v276 = vshrl.u32 %v275, 7
        %v277 = vlaneseq
        %v278 = vshrl.u32 %v277, 7
        %v279 = vsub.s32 0, %v278
        %v280 = vrot.slane %v225, %v279
        %v281 = vlaneseq
        %v282 = vshrl.u32 %v281, 7
        %v283 = vsub.s32 1, %v282
        %v284 = vrot.slane %v225, %v283
        %vm285 = vcmp.eq.s32.totalorder %v280, %v276
        %vm286 = vcmp.eq.s32.totalorder %v284, %v276
        %v287 = vsel %vm285, 1, 0
        %v288 = vsel %vm286, 1, 0
        %v289 = vcvt.s32.f32 %v287
        %v290 = vcvt.s32.f32 %v288
        %v291 = vld [vmem:[#allocation2] sm:$0xff]
        %v293 = vcombine.high %v274, %v274
        %v295 = vmul.f32 %v289, %v274
        %v296 = vmul.f32 %v290, %v293
        %v299 = vcombine.low %v295, %v296
        %v301 = vadd.f32 %v291, %v299
        %302 = vst [vmem:[#allocation2] sm:$0xff] %v301
        %v303 = vld [vmem:[#allocation3] sm:$0xff]
        %v304 = vmul.f32 %v274, %v274
        %v306 = vcombine.high %v304, %v304
        %v308 = vadd.f32 %v289, %v304
        %v309 = vadd.f32 %v290, %v306
        %v312 = vcombine.low %v308, %v309
        %v314 = vadd.f32 %v303, %v312
        %315 = vst [vmem:[#allocation3] sm:$0xff] %v314
        // Predicated region
        $region41: #{tpu_custom_call.1} parent=27 // pred_check
          %p316 = pneg %p218
        $region42: #{tpu_custom_call.1} parent=27 // pred_check_branch
          %318 = sbr.rel (%p316) target = $region44
        $region43: #{tpu_custom_call.1} parent=27 // pred_region
          %v319 = vld [vmem:[#allocation2] sm:$0xff]
          %v321 = vcombine.high %v319, %v319
          %v323 = vsel %vm229, %v319, 0.0
          %v324 = vsel %vm229, %v321, 0.0
          %v325 = vadd.f32 %v323, %v324
          %326 = vadd.xlane.f32.xlu0 %v325
          %v327 = vpop.xlane.xlu0 %326
          %v328 = vld [vmem:[#allocation3] sm:$0xff]
          %v330 = vcombine.high %v328, %v328
          %v332 = vsel %vm229, %v328, 0.0
          %v333 = vsel %vm229, %v330, 0.0
          %v334 = vadd.f32 %v332, %v333
          %335 = vadd.xlane.f32.xlu0 %v334
          %v336 = vpop.xlane.xlu0 %335
          %v337 = vmul.f32 %v327, 2.0
          %v338 = vadd.f32 %v336, 1e-06
          %v339 = vrcp.pop %v338
          %v340 = vmul.f32 %v337, %v339
          %v341 = vsel %vm229, %v340, 0.0
          %v342 = vrot.slane %v341, 4
          %v343 = vadd.f32 %v341, %v342
          %v344 = vrot.slane %v343, 2
          %v345 = vadd.f32 %v343, %v344
          %v346 = vrot.slane %v345, 1
          %v347 = vadd.f32 %v345, %v346
          %v348 = vmul.f32 %v347, 0.25
          %vm349 = vcmask 0
          %350 = vst.msk [vmem:[%s217] sm:$0x1] %vm349, %v348
        $region44: #{tpu_custom_call.1} parent=27 // pred_fallthru
          _
        %p351 = scmp.lt.s32.totalorder %s23, 1
        %s352 = scalar_select %p351, %s23, 1
        %s353 = scalar_lea.vmem %s2, %s352
        // Predicated region
        $region45: #{tpu_custom_call.1} parent=27 // pred_check
          %p354 = pneg %p105
        $region46: #{tpu_custom_call.1} parent=27 // pred_check_branch
          %356 = sbr.rel (%p354) target = $region48
        $region47: #{tpu_custom_call.1} parent=27 // pred_region
          _
        $region48: #{tpu_custom_call.1} parent=27 // pred_fallthru
          _
      $region28: #{tpu_custom_call.1} parent=5 // pred_fallthru
        _
      %p357 = scmp.le.s32.totalorder 2, %s14
      // Predicated region
      $region49: #{tpu_custom_call.1} parent=5 // pred_check
        %p358 = pneg %p357
      $region50: #{tpu_custom_call.1} parent=5 // pred_check_branch
        %360 = sbr.rel (%p358) target = $region52
      $region51: #{tpu_custom_call.1} parent=5 // pred_region
        %s361 = ssub.s32 %s14, 2
        // Predicated region
        $region53: #{tpu_custom_call.1} parent=51 // pred_check
          %p362 = pneg %p111
        $region54: #{tpu_custom_call.1} parent=51 // pred_check_branch
          %364 = sbr.rel (%p362) target = $region56
        $region55: #{tpu_custom_call.1} parent=51 // pred_region
          %p365 = scmp.lt.s32.totalorder %s25, 1
          %s366 = scalar_select %p365, %s25, 1
          %s367 = scalar_lea.vmem %s2, %s366
        $region56: #{tpu_custom_call.1} parent=51 // pred_fallthru
          _
      $region52: #{tpu_custom_call.1} parent=5 // pred_fallthru
        _
    $region6: #{tpu_custom_call.1} parent=1 // loop_footer
      %s18 = sadd.s32 1, %s14
    $region7: #{tpu_custom_call.1} parent=1 // loop_footer_branch
      %13 = sbr.rel target = $region3
    $region8: #{tpu_custom_call.1} parent=1 // loop_exit
      _
    %368 = vsyncpa [#allocation5], 1
    %s369 = scalar_lea.sflag [#allocation5], 1
    %370 = vsyncpa %s369, 1
    %371 = vsyncpa [#allocation7], 1
    %s372 = scalar_lea.sflag [#allocation7], 1
    %373 = vsyncpa %s372, 1

</llo_original>
